<compile_context>
chip_gen: v5e
topology: v5e:2x2
jax: 0.10.0
libtpu: 0.0.40
codegen_flags: <defaults>
</compile_context>

<pallas_src>
import math

import jax
import jax.numpy as jnp
from jax.experimental import pallas as pl
from jax.experimental.pallas import tpu as pltpu


_LANE = 128
# Explicit scoped-VMEM limit (v5e's default is only 16 MiB of 128; v6e 32/128;
# v7x 32/64).  32 MiB is valid on every generation.
_VMEM_LIMIT_BYTES = 32 * 1024 * 1024
# Tile-sizing budget: keep the double-buffered working set well under the
# scoped limit so the same tiles also fit v7x's smaller physical VMEM.
_VMEM_TILE_BUDGET = 20 * 1024 * 1024


def _round_up(v: int, m: int) -> int:
    return (v + m - 1) // m * m


def _pick_s_tile(d: int, tr: int, s: int, budget_bytes: int) -> int:
    """Largest multiple-of-128 S tile whose double-buffered working set fits."""
    ts = min(_round_up(s, _LANE), 2048)
    while ts > _LANE:
        # 2 buffers x (bf16 weight tile + f32 logits tile + f32 bias tile)
        # + 2 buffers x bf16 x tile.
        need = 2 * (d * ts * 2 + tr * ts * 4 + ts * 4) + 2 * (tr * d * 2)
        if need <= budget_bytes:
            break
        ts -= _LANE
    return ts


# ----------------------------------------------------------------------------
# Kernels
# ----------------------------------------------------------------------------
def logits_kernel(x_ref, wt_ref, b_ref, out_ref):
    # cce backend: one (tR, D) x (D, tS) MXU matmul tile, bf16 operands,
    # f32 accumulation, f32 bias add.
    out_ref[...] = (
        jnp.dot(x_ref[...], wt_ref[...], preferred_element_type=jnp.float32)
        + b_ref[...]
    ).astype(out_ref.dtype)


def pair_loss_kernel(xp_ref, scal_ref, loss_ref):
    # xp_ref: (N, 2D) f32 -- row i is [positive_i, anchor_i] (lane-contiguous).
    n = xp_ref.shape[0]
    d = xp_ref.shape[1] // 2
    pos = xp_ref[:, :d].astype(jnp.float32)      # out_positive (N, D)
    anc = xp_ref[:, d:].astype(jnp.float32)      # out_anchor   (N, D)

    w = scal_ref[0]    # torch.clamp(self.w, 1e-6) result is discarded -> raw w
    b1 = scal_ref[1]
    b2 = scal_ref[2]

    # Single full-depth N x N x D MXU matmul feeds BOTH similarity matrices.
    dots = jax.lax.dot_general(                              # pos @ anc^T
        pos, anc, (((1,), (1,)), ((), ())),
        preferred_element_type=jnp.float32)                  # (N, N)

    # Squared norms: pos along sublanes (VPU reduce), anchor norms as a (1, N)
    # lane-major row via a skinny (1, D) x (D, N) matmul (N result pops -- no
    # K=1 outer product pushing N*N pops through the MRF).
    pos_sq = jnp.sum(pos * pos, axis=-1, keepdims=True)      # (N, 1)
    ones_row = jnp.ones((1, d), dtype=jnp.float32)
    anc_sq_row = jax.lax.dot_general(                        # (1, N)
        ones_row, anc * anc, (((1,), (1,)), ((), ())),
        preferred_element_type=jnp.float32)

    # torch cosine_similarity clamp: dot / max(||p||*||a||, 1e-8).
    # sqrt(max(||p||^2*||a||^2, 1e-16)) is identical; rsqrt rides the EUP slot
    # and the outer product is a pure VPU (N,1)x(1,N) broadcast multiply.
    inv_denom = jax.lax.rsqrt(jnp.maximum(pos_sq * anc_sq_row, 1e-16))  # (N, N)
    ap_sim = dots * inv_denom * w + b1

    prior = math.log((1.0 / n) / (1.0 - 1.0 / n))            # static at trace
    cos_sim = dots + b2 + prior

    row_ids = jax.lax.broadcasted_iota(jnp.int32, (n, n), 0)
    col_ids = jax.lax.broadcasted_iota(jnp.int32, (n, n), 1)
    eye = (row_ids == col_ids).astype(jnp.float32)           # mask == identity

    # CrossEntropyLoss(ap_sim, arange(N)), mean over rows.
    row_max = jnp.max(ap_sim, axis=-1, keepdims=True)
    lse = jnp.log(jnp.sum(jnp.exp(ap_sim - row_max), axis=-1, keepdims=True)) + row_max
    diag = jnp.sum(ap_sim * eye, axis=-1, keepdims=True)     # ap_sim[i, i]
    ce = jnp.sum(lse - diag, keepdims=True) / n              # (1, 1)

    # BCEWithLogitsLoss(cos_sim, eye), mean over N*N elements.
    z = cos_sim
    bce_el = jnp.maximum(z, 0.0) - z * eye + jnp.log1p(jnp.exp(-jnp.abs(z)))
    bce = jnp.sum(bce_el, keepdims=True) / (n * n)           # (1, 1)

    total = ce + bce
    loss_ref[0, 0] = total[0, 0]                             # (1, 1) SMEM out


# ----------------------------------------------------------------------------
# Wrapper
# ----------------------------------------------------------------------------
def _cce_logits(x, wt, b):
    """Tiled, lane-dense, bf16-weight logits = x @ Wt + b."""
    b2n, d = x.shape
    s = wt.shape[1]

    # Row tile: full batch when small (always a legal full-dim block),
    # otherwise 256-row tiles (multiple of 8/16; ragged edge handled by Pallas).
    tr = b2n if b2n <= 256 else 256
    ts = _pick_s_tile(d, tr, s, _VMEM_TILE_BUDGET)           # multiple of 128
    s_pad = _round_up(s, ts)

    # In production, do the pad + bf16 cast once at parameter-prep time.
    wt_mx = wt.astype(jnp.bfloat16)
    b_f32 = b.astype(jnp.float32)
    if s_pad != s:
        wt_mx = jnp.pad(wt_mx, ((0, 0), (0, s_pad - s)))
        b_f32 = jnp.pad(b_f32, ((0, 0), (0, s_pad - s)))
    x_mx = x.astype(jnp.bfloat16)

    grid = (pl.cdiv(b2n, tr), s_pad // ts)
    logits_pad = pl.pallas_call(
        logits_kernel,
        out_shape=jax.ShapeDtypeStruct((b2n, s_pad), jnp.float32),
        grid=grid,
        in_specs=[
            pl.BlockSpec((tr, d), lambda i, j: (i, 0)),      # x rows
            pl.BlockSpec((d, ts), lambda i, j: (0, j)),      # weight columns
            pl.BlockSpec((1, ts), lambda i, j: (0, j)),      # bias columns
        ],
        out_specs=pl.BlockSpec((tr, ts), lambda i, j: (i, j)),
        compiler_params=pltpu.CompilerParams(
            dimension_semantics=("parallel", "parallel"),    # v7x: 2 TCs
            vmem_limit_bytes=_VMEM_LIMIT_BYTES,
        ),
        cost_estimate=pl.CostEstimate(
            flops=2 * b2n * d * s_pad,
            transcendentals=0,
            bytes_accessed=2 * b2n * d + 2 * d * s_pad + 4 * s_pad + 4 * b2n * s_pad,
        ),
    )(x_mx, wt_mx, b_f32)

    return logits_pad[:, :s] if s_pad != s else logits_pad


def angular_proximity_magnet_forward(x, params, target=None):
    assert x.shape[1] >= 2                       # mirrors the torch assert
    assert x.shape[0] % 2 == 0, "rows must come in (positive, anchor) pairs"
    b2n, d = x.shape

    cce_prediction = _cce_logits(x, params["wt"], params["b"])

    if target is None:
        return x, cce_prediction

    n = b2n // 2
    # Zero-cost row-major view: row i = [positive_i, anchor_i]  -> lane slices
    # inside the kernel instead of stride-2 sublane reads.
    x_pairs = x.reshape(n, 2 * d).astype(jnp.float32)
    # Pack the three learnable scalars into one SMEM input (single DMA).
    scalars = jnp.concatenate(
        [params["w"], params["b1"], params["b2"]]).astype(jnp.float32)

    loss = pl.pallas_call(
        pair_loss_kernel,
        out_shape=jax.ShapeDtypeStruct((1, 1), jnp.float32),
        in_specs=[
            pl.BlockSpec(memory_space=pltpu.MemorySpace.VMEM),
            pl.BlockSpec(memory_space=pltpu.MemorySpace.SMEM),
        ],
        out_specs=pl.BlockSpec(memory_space=pltpu.MemorySpace.SMEM),
        compiler_params=pltpu.CompilerParams(
            vmem_limit_bytes=_VMEM_LIMIT_BYTES),
        cost_estimate=pl.CostEstimate(
            flops=2 * n * n * d + 2 * n * d + 16 * n * n,
            transcendentals=4 * n * n + 2 * n,
            bytes_accessed=4 * (n * 2 * d + 3 + 1),
        ),
    )(x_pairs, scalars)

    return loss[0, 0], cce_prediction


# ----------------------------------------------------------------------------
# Pure-JAX reference (torch semantics) for a silent correctness check
# ----------------------------------------------------------------------------
def _reference(x, params):
    # cce backend with the same bf16 operand cast + f32 accumulation the kernel uses.
    cce = jnp.dot(x.astype(jnp.bfloat16), params["wt"].astype(jnp.bfloat16),
                  preferred_element_type=jnp.float32) + params["b"]
    n2, d = x.shape
    n = n2 // 2
    xr = x.reshape(n, 2, d)
    pos, anc = xr[:, 0, :], xr[:, 1, :]
    dots = pos @ anc.T
    denom = jnp.maximum(
        jnp.linalg.norm(pos, axis=-1, keepdims=True)
        * jnp.linalg.norm(anc, axis=-1, keepdims=True).T,
        1e-8,
    )
    ap = dots / denom * params["w"][0] + params["b1"][0]
    cs = dots + params["b2"][0] + math.log((1.0 / n) / (1.0 - 1.0 / n))
    eye = jnp.eye(n, dtype=jnp.float32)
    ce = jnp.mean(jax.nn.logsumexp(ap, axis=-1) - jnp.diagonal(ap))
    bce = jnp.mean(jnp.maximum(cs, 0.0) - cs * eye + jnp.log1p(jnp.exp(-jnp.abs(cs))))
    return ce + bce, cce


# ----------------------------------------------------------------------------
if __name__ == "__main__":
    key = jax.random.PRNGKey(0)
    emb_dim = 32
    spk_count = 16
    n_pairs = 8
    batch = 2 * n_pairs   # (positive, anchor) pairs interleaved along rows

    k_x, k_w, k_b = jax.random.split(key, 3)
    x = jax.random.normal(k_x, (batch, emb_dim), dtype=jnp.float32)

    params = {
        # torch Linear(emb_dim, spk_count): weight (S, D) -> stored transposed (D, S)
        "wt": (jax.random.normal(k_w, (emb_dim, spk_count), dtype=jnp.float32)
               / math.sqrt(emb_dim)),
        "b": jax.random.normal(k_b, (1, spk_count), dtype=jnp.float32) * 0.01,
        "w": jnp.array([10.0], dtype=jnp.float32),    # init_w
        "b1": jnp.array([-5.0], dtype=jnp.float32),   # init_b
        "b2": jnp.array([5.54], dtype=jnp.float32),
    }

    # The target value itself is unused by the loss (torch uses arange(N));
    # its presence just selects the loss branch.
    target = jnp.arange(batch, dtype=jnp.int32)

    loss, cce_pred = angular_proximity_magnet_forward(x, params, target=target)
    jax.block_until_ready((loss, cce_pred))

    ref_loss, ref_cce = _reference(x, params)
    assert jnp.allclose(loss, ref_loss, atol=1e-4, rtol=1e-4)
    assert jnp.allclose(cce_pred, ref_cce, atol=1e-4, rtol=1e-4)

    # target=None branch: returns (x, cce_prediction)
    x_out, cce_only = angular_proximity_magnet_forward(x, params, target=None)
    jax.block_until_ready((x_out, cce_only))
    assert jnp.allclose(cce_only, ref_cce, atol=1e-4, rtol=1e-4)

    print("KERNEL_OK")
</pallas_src>

<mosaic_0001>
module attributes {stable_mosaic.version = 11 : i64} {
  func.func @logits_kernel(%arg0: i32, %arg1: i32, %arg2: memref<16x32xbf16, #tpu.memory_space<vmem>>, %arg3: memref<32x128xbf16, #tpu.memory_space<vmem>>, %arg4: memref<1x128xf32, #tpu.memory_space<vmem>>, %arg5: memref<16x128xf32, #tpu.memory_space<vmem>>) attributes {dimension_semantics = [#tpu.dimension_semantics<parallel>, #tpu.dimension_semantics<parallel>], iteration_bounds = array<i64: 1, 1>, scalar_prefetch = 0 : i64, scratch_operands = 0 : i64, tpu.core_type = #tpu.core_type<tc>, window_params = [{transform_indices = @transform_0, window_bounds = array<i64: 16, 32>}, {transform_indices = @transform_1, window_bounds = array<i64: 32, 128>}, {transform_indices = @transform_2, window_bounds = array<i64: 1, 128>}, {transform_indices = @transform_3, window_bounds = array<i64: 16, 128>}]} {
    %c0 = arith.constant 0 : index
    %c0_0 = arith.constant 0 : index
    %0 = vector.load %arg2[%c0, %c0_0] : memref<16x32xbf16, #tpu.memory_space<vmem>>, vector<16x32xbf16>
    %c0_1 = arith.constant 0 : index
    %c0_2 = arith.constant 0 : index
    %1 = vector.load %arg3[%c0_1, %c0_2] : memref<32x128xbf16, #tpu.memory_space<vmem>>, vector<32x128xbf16>
    %cst = arith.constant dense<0.000000e+00> : vector<16x128xf32>
    %2 = tpu.matmul %0, %1, %cst {dimension_numbers = #tpu.dot_dimension_numbers<[1], [0], [0], [1], [0, 0, 1, 1], [], []>} : vector<16x32xbf16>, vector<32x128xbf16>, vector<16x128xf32> -> vector<16x128xf32>
    %c0_3 = arith.constant 0 : index
    %c0_4 = arith.constant 0 : index
    %3 = vector.load %arg4[%c0_3, %c0_4] : memref<1x128xf32, #tpu.memory_space<vmem>>, vector<1x128xf32>
    %4 = vector.broadcast %3 : vector<1x128xf32> to vector<16x128xf32>
    %5 = arith.addf %2, %4 : vector<16x128xf32>
    %c0_5 = arith.constant 0 : index
    %c0_6 = arith.constant 0 : index
    %6 = vector.load %arg5[%c0_5, %c0_6] : memref<16x128xf32, #tpu.memory_space<vmem>>, vector<16x128xf32>
    tpu.vector_store %arg5[%c0_5, %c0_6], %5 {strides = array<i32>} : memref<16x128xf32, #tpu.memory_space<vmem>>, vector<16x128xf32>,
    return
  }
  func.func @transform_0(%arg0: i32, %arg1: i32) -> (i32, i32) {
    %c0_i32 = arith.constant 0 : i32
    %c0_i32_0 = arith.constant 0 : i32
    return %arg0, %c0_i32 : i32, i32
  }
  func.func @transform_1(%arg0: i32, %arg1: i32) -> (i32, i32) {
    %c0_i32 = arith.constant 0 : i32
    %c0_i32_0 = arith.constant 0 : i32
    return %c0_i32, %arg1 : i32, i32
  }
  func.func @transform_2(%arg0: i32, %arg1: i32) -> (i32, i32) {
    %c0_i32 = arith.constant 0 : i32
    %c0_i32_0 = arith.constant 0 : i32
    return %c0_i32, %arg1 : i32, i32
  }
  func.func @transform_3(%arg0: i32, %arg1: i32) -> (i32, i32) {
    %c0_i32 = arith.constant 0 : i32
    return %arg0, %arg1 : i32, i32
  }
}

</mosaic_0001>

<llo_original>
// kernel: tpu_custom_call.1
$region0: #{tpu_custom_call.1}
  #allocation0 [shape = 'u32[]', space=smem, size = 0x4, offset = 0x4, fixed_abs, tag = 'smem constant byte address 0x4 - core index']
  #allocation1 [shape = 'u32[72,128]{1,0:T(1,128)}', space=vmem, size = 0x9000, scoped, tag = 'internal scratch']
  %s0 = inlined_call_operand.hbm [shape: bf16[16,32], index: 0, kind: input, shape index: {}]
  %s1 = inlined_call_operand.hbm [shape: bf16[32,128], index: 1, kind: input, shape index: {}]
  %s2 = inlined_call_operand.vmem [shape: f32[1,128], index: 2, kind: input, shape index: {}]
  %s3 = inlined_call_operand.hbm [shape: f32[16,128], index: 3, kind: output, shape index: {}]
  %s4 = sld [smem:[#allocation0]]
  $region30: #{tpu_custom_call.1} parent=0
    _
  %s6 = ssub.s32 1, %s4
  %s7 = scalar_select 0, %s6, %s4
  $region1: #{tpu_custom_call.1} parent=0
    #allocation2 [shape = 'u8[4096]{0}', space=vmem, size = 0x1000, scoped, tag = 'input window, operand 0, single buffered']
    #allocation3 [shape = 's32[1]{0}', space=sflag, size = 0x4, scoped, tag = 'scoped memory for tpu_custom_call.1']
    #allocation4 [shape = 's32[1]{0}', space=sflag, size = 0x4, scoped, tag = 'scoped memory for tpu_custom_call.1']
    #allocation5 [shape = 'u8[8192]{0}', space=vmem, size = 0x2000, scoped, tag = 'input window, operand 1, single buffered']
    #allocation6 [shape = 's32[1]{0}', space=sflag, size = 0x4, scoped, tag = 'scoped memory for tpu_custom_call.1']
    #allocation7 [shape = 'u8[8192]{0}', space=vmem, size = 0x2000, scoped, tag = 'output window, operand 0, single buffered']
    %8 = vsyncpa [#allocation3], 0
    %9 = vsyncpa [#allocation6], 0
    %10 = vsyncpa [#allocation4], 0
    // Predicated region
    $region2: #{tpu_custom_call.1} parent=1 // pred_check
      _
    $region3: #{tpu_custom_call.1} parent=1 // pred_check_branch
      %12 = sbr.rel (0) target = $region5
    $region4: #{tpu_custom_call.1} parent=1 // pred_region
      %14 = vsyncadd [#allocation3], 0
      %s15 = sshll.u32 %s0, 4
      %s16 = int_to_ptr.hbm [resolvable:$true] %s15
      %s17 = sshll.u32 [#allocation2], 4
      %s18 = int_to_ptr.vmem [resolvable:$true] %s17
      %23 = dma.hbm_to_vmem [thread:$0]  %s16, 128, %s18, [#allocation3], 64, 64, 4
    $region5: #{tpu_custom_call.1} parent=1 // pred_fallthru
      _
    // Predicated region
    $region6: #{tpu_custom_call.1} parent=1 // pred_check
      _
    $region7: #{tpu_custom_call.1} parent=1 // pred_check_branch
      %25 = sbr.rel (0) target = $region9
    $region8: #{tpu_custom_call.1} parent=1 // pred_region
      %27 = vsyncadd [#allocation6], 0
      %s28 = sshll.u32 %s1, 4
      %s29 = int_to_ptr.hbm [resolvable:$true] %s28
      %s30 = sshll.u32 [#allocation5], 4
      %s31 = int_to_ptr.vmem [resolvable:$true] %s30
      %36 = dma.hbm_to_vmem [thread:$0]  %s29, 256, %s31, [#allocation6], 64, 64, 4
    $region9: #{tpu_custom_call.1} parent=1 // pred_fallthru
      _
    // Predicated region
    $region10: #{tpu_custom_call.1} parent=1 // pred_check
      _
    $region11: #{tpu_custom_call.1} parent=1 // pred_check_branch
      %38 = sbr.rel (0) target = $region13
    $region12: #{tpu_custom_call.1} parent=1 // pred_region
      _
    $region13: #{tpu_custom_call.1} parent=1 // pred_fallthru
      _
    // Predicated region
    $region14: #{tpu_custom_call.1} parent=1 // pred_check
      _
    $region15: #{tpu_custom_call.1} parent=1 // pred_check_branch
      %40 = sbr.rel (0) target = $region17
    $region16: #{tpu_custom_call.1} parent=1 // pred_region
      %42 = dma.done [#allocation3], 128
    $region17: #{tpu_custom_call.1} parent=1 // pred_fallthru
      _
    // Predicated region
    $region18: #{tpu_custom_call.1} parent=1 // pred_check
      _
    $region19: #{tpu_custom_call.1} parent=1 // pred_check_branch
      %44 = sbr.rel (0) target = $region21
    $region20: #{tpu_custom_call.1} parent=1 // pred_region
      %46 = dma.done [#allocation6], 256
    $region21: #{tpu_custom_call.1} parent=1 // pred_fallthru
      _
    %v48 = vld [vmem:[#allocation2] sm:$0xf]
    %v49 = vld [vmem:[#allocation2 + $0x4] sm:$0xf]
    %v50 = vld [vmem:[#allocation5] sm:$0xf]
    %v51 = vld [vmem:[#allocation5 + $0x4] sm:$0xf]
    %v52 = vld [vmem:[#allocation5 + $0x8] sm:$0xf]
    %v53 = vld [vmem:[#allocation5 + $0xc] sm:$0xf]
    %v54 = vld [vmem:[%s2] sm:$0x1]
    %v56 = vperm.slane %v54, 0
    %v60 = vunpack.c.l.b16 %v48
    %v61 = vunpack.c.l.b16 %v49
    %v62 = vpack.c.b16 %v61, %v60
    %v67 = vunpack.c.l.b16 %v50
    %v68 = vunpack.c.l.b16 %v51
    %v69 = vunpack.c.l.b16 %v52
    %v70 = vunpack.c.l.b16 %v53
    %v71 = vpack.c.b16 %v68, %v67
    %v72 = vpack.c.b16 %v70, %v69
    %vm75 = vcmask 261120
    %v77 = vsel %vm75, %v62, 0
    %79 = vmatpush.bf16.msra.mxu0 0
    %80 = vmatpush.bf16.msra.mxu0 0
    %81 = vmatpush.bf16.msra.mxu0 0
    %82 = vmatpush.bf16.msra.mxu0 0
    %83 = vmatpush.bf16.msra.mxu0 0
    %84 = vmatpush.bf16.msra.mxu0 0
    %85 = vmatpush.bf16.msra.mxu0 %v72
    %86 = vmatpush.bf16.msra.mxu0 %v71
    %87 = vmatmul.bf16.gmra.mxu0 %v77
    %v88 = vpop.f32.mrf.mxu0
    %v89 = vadd.f32 %v56, %v88
    %v90 = vpop.f32.mrf.mxu0
    %v91 = vadd.f32 %v56, %v90
    %92 = vdwg.mxu0
    %93 = vst [vmem:[#allocation7] sm:$0xff] %v89
    %94 = vst [vmem:[#allocation7 + $0x8] sm:$0xff] %v91
    // Predicated region
    $region22: #{tpu_custom_call.1} parent=1 // pred_check
      _
    $region23: #{tpu_custom_call.1} parent=1 // pred_check_branch
      %96 = sbr.rel (0) target = $region25
    $region24: #{tpu_custom_call.1} parent=1 // pred_region
      %98 = vsyncadd [#allocation4], 0
      %s99 = sshll.u32 [#allocation7], 4
      %s100 = int_to_ptr.vmem [resolvable:$true] %s99
      %s101 = sshll.u32 %s3, 4
      %s102 = int_to_ptr.hbm [resolvable:$true] %s101
      %107 = dma.vmem_to_hbm [thread:$0]  %s100, 256, %s102, [#allocation4], 128, 128, 8
    $region25: #{tpu_custom_call.1} parent=1 // pred_fallthru
      _
    // Predicated region
    $region26: #{tpu_custom_call.1} parent=1 // pred_check
      _
    $region27: #{tpu_custom_call.1} parent=1 // pred_check_branch
      %109 = sbr.rel (0) target = $region29
    $region28: #{tpu_custom_call.1} parent=1 // pred_region
      %111 = dma.done [#allocation4], 256
    $region29: #{tpu_custom_call.1} parent=1 // pred_fallthru
      _
    %112 = vsyncpa [#allocation3], 1
    %113 = vsyncpa [#allocation6], 1
    %114 = vsyncpa [#allocation4], 1

</llo_original>
